<compile_context>
chip_gen: v5e
topology: v5e:2x2
jax: 0.10.0
libtpu: 0.0.40
codegen_flags: <defaults>
</compile_context>

<pallas_src>
import math

import jax
import jax.numpy as jnp
from jax.experimental import pallas as pl
from jax.experimental.pallas import tpu as pltpu


def _vmem_limit_bytes():
    """Generation-conditional scoped-VMEM budget (~3/4 of physical, capped)."""
    try:
        cap = pltpu.get_tpu_info().vmem_capacity_bytes
        return min(int(cap * 3 // 4), 100 * 1024 * 1024)
    except Exception:
        return 48 * 1024 * 1024  # safe on v5e/v6e/v7x


_VMEM_LIMIT = _vmem_limit_bytes()


def _pick_block(n, target):
    """Largest divisor of n that is <= target AND a multiple of 8 (sublane
    aligned). Falls back to the full dimension (always legal for a BlockSpec)
    when no such divisor exists -- never returns tiny/unaligned blocks that
    would violate the (8,128) constraint or explode the grid-step count."""
    if n <= target:
        return n
    for cand in range(min(target, n), 7, -1):
        if n % cand == 0 and cand % 8 == 0:
            return cand
    return n


# ----------------------------------------------------------------------------
# Projection kernel with fused head split (single wide matmul per tile):
#   out[b, h, n, :] = (x[b, n, :] @ W)[:, h*Dh:(h+1)*Dh] + b[h*Dh:(h+1)*Dh]
# ----------------------------------------------------------------------------
def _proj_heads_kernel(x_ref, w_ref, b_ref, o_ref):
    # x: (1, bn, in_dim)  w: (in_dim, internal) bf16  b: (1, internal) f32
    # o: (1, H, bn, Dh) bf16
    acc = jnp.dot(x_ref[0].astype(w_ref.dtype), w_ref[...],
                  preferred_element_type=jnp.float32)
    acc = acc + b_ref[...].astype(jnp.float32)
    H, Dh = o_ref.shape[1], o_ref.shape[3]
    for h in range(H):  # static unroll: lane slices of the f32 accumulator
        o_ref[0, h] = acc[:, h * Dh:(h + 1) * Dh].astype(o_ref.dtype)


def proj_to_heads(x, w_t, b_row, num_heads, *, block_n=1024):
    """x: (B, N, in_dim); w_t: (in_dim, internal) bf16; b_row: (1, internal).
    Returns (B, H, N, Dh) bf16 == separate_heads(x @ W.T + b)."""
    B, N, in_dim = x.shape
    internal = w_t.shape[1]
    H = num_heads
    Dh = internal // H
    bn = _pick_block(N, block_n)
    grid = (B, N // bn)
    return pl.pallas_call(
        _proj_heads_kernel,
        grid=grid,
        in_specs=[
            pl.BlockSpec((1, bn, in_dim), lambda b, nb: (b, nb, 0)),
            pl.BlockSpec((in_dim, internal), lambda b, nb: (0, 0)),
            pl.BlockSpec((1, internal), lambda b, nb: (0, 0)),
        ],
        out_specs=pl.BlockSpec((1, H, bn, Dh), lambda b, nb: (b, 0, nb, 0)),
        out_shape=jax.ShapeDtypeStruct((B, H, N, Dh), jnp.bfloat16),
        compiler_params=pltpu.CompilerParams(
            dimension_semantics=("parallel", "parallel"),
            vmem_limit_bytes=_VMEM_LIMIT),
    )(x, w_t, b_row)


# ----------------------------------------------------------------------------
# Flash-style scaled-dot-product attention (online softmax over k blocks)
# ----------------------------------------------------------------------------
def _flash_attn_kernel(q_ref, k_ref, v_ref, o_ref, m_ref, l_ref, acc_ref):
    ki = pl.program_id(3)

    @pl.when(ki == 0)
    def _init():
        m_ref[...] = jnp.full(m_ref.shape, -jnp.inf, dtype=m_ref.dtype)
        l_ref[...] = jnp.zeros(l_ref.shape, dtype=l_ref.dtype)
        acc_ref[...] = jnp.zeros(acc_ref.shape, dtype=acc_ref.dtype)

    q = q_ref[0, 0]   # (bq, Dh) bf16 -- pre-scaled by 1/sqrt(Dh) at init time
    k = k_ref[0, 0]   # (bk, Dh) bf16
    v = v_ref[0, 0]   # (bk, Dh) bf16

    # q @ k^T without materializing a transpose: contract last dims of both.
    s = jax.lax.dot_general(q, k, (((1,), (1,)), ((), ())),
                            preferred_element_type=jnp.float32)      # (bq, bk) f32

    m_prev = m_ref[...]
    m_new = jnp.maximum(m_prev, jnp.max(s, axis=-1, keepdims=True))
    alpha = jnp.exp(m_prev - m_new)
    p = jnp.exp(s - m_new)
    l_ref[...] = alpha * l_ref[...] + jnp.sum(p, axis=-1, keepdims=True)
    acc_ref[...] = alpha * acc_ref[...] + jax.lax.dot_general(
        p.astype(v.dtype), v, (((1,), (0,)), ((), ())),
        preferred_element_type=jnp.float32)
    m_ref[...] = m_new

    @pl.when(ki == pl.num_programs(3) - 1)
    def _finalize():
        # Deferred normalization; divide moved onto the EUP slot (approx rcp).
        inv_l = pl.reciprocal(l_ref[...], approx=True)
        o_ref[0, 0] = (acc_ref[...] * inv_l).astype(o_ref.dtype)


def flash_attention(q, k, v, *, block_q=1024, block_k=1024):
    """q: (B, H, Nq, Dh) pre-scaled bf16; k, v: (B, H, Nk, Dh) bf16.
    Returns (B, H, Nq, Dh) bf16."""
    B, H, Nq, Dh = q.shape
    Nk = k.shape[2]
    bq = _pick_block(Nq, block_q)
    bk = _pick_block(Nk, block_k)
    grid = (B, H, Nq // bq, Nk // bk)
    return pl.pallas_call(
        _flash_attn_kernel,
        grid=grid,
        in_specs=[
            pl.BlockSpec((1, 1, bq, Dh), lambda b, h, qi, ki: (b, h, qi, 0)),
            pl.BlockSpec((1, 1, bk, Dh), lambda b, h, qi, ki: (b, h, ki, 0)),
            pl.BlockSpec((1, 1, bk, Dh), lambda b, h, qi, ki: (b, h, ki, 0)),
        ],
        out_specs=pl.BlockSpec((1, 1, bq, Dh), lambda b, h, qi, ki: (b, h, qi, 0)),
        out_shape=jax.ShapeDtypeStruct((B, H, Nq, Dh), jnp.bfloat16),
        scratch_shapes=[
            pltpu.VMEM((bq, 1), jnp.float32),   # running max  m
            pltpu.VMEM((bq, 1), jnp.float32),   # running sum  l
            pltpu.VMEM((bq, Dh), jnp.float32),  # unnormalized accumulator
        ],
        compiler_params=pltpu.CompilerParams(
            dimension_semantics=("parallel", "parallel", "parallel", "arbitrary"),
            vmem_limit_bytes=_VMEM_LIMIT),
    )(q, k, v)


# ----------------------------------------------------------------------------
# Output projection with fused head recombination: heads are concatenated
# in-VMEM (lane assembly) and contracted in ONE depth-internal_dim matmul.
#   out[b, n, :] = concat_h(oh[b, h, n, :]) @ Wo + bo
# ----------------------------------------------------------------------------
def _out_proj_kernel(oh_ref, w_ref, b_ref, o_ref):
    # oh: (1, H, bn, Dh) bf16  w: (internal, E) bf16  b: (1, E) f32  o: (1, bn, E)
    H = oh_ref.shape[1]
    if H == 1:
        x = oh_ref[0, 0]
    else:
        x = jnp.concatenate([oh_ref[0, h] for h in range(H)], axis=-1)  # (bn, internal)
    acc = jnp.dot(x, w_ref[...], preferred_element_type=jnp.float32)
    o_ref[0] = (acc + b_ref[...].astype(jnp.float32)).astype(o_ref.dtype)


def out_proj_from_heads(oh, w_t, bias_row, out_dtype, *, block_n=1024):
    """oh: (B, H, N, Dh) bf16; w_t: (internal, E) bf16; bias_row: (1, E).
    Returns (B, N, E) in out_dtype. Lane-dense store of width E."""
    B, H, N, Dh = oh.shape
    E = w_t.shape[-1]
    internal = H * Dh
    bn = _pick_block(N, block_n)
    grid = (B, N // bn)
    return pl.pallas_call(
        _out_proj_kernel,
        grid=grid,
        in_specs=[
            pl.BlockSpec((1, H, bn, Dh), lambda b, nb: (b, 0, nb, 0)),
            pl.BlockSpec((internal, E), lambda b, nb: (0, 0)),
            pl.BlockSpec((1, E), lambda b, nb: (0, 0)),
        ],
        out_specs=pl.BlockSpec((1, bn, E), lambda b, nb: (b, nb, 0)),
        out_shape=jax.ShapeDtypeStruct((B, N, E), out_dtype),
        compiler_params=pltpu.CompilerParams(
            dimension_semantics=("parallel", "parallel"),
            vmem_limit_bytes=_VMEM_LIMIT),
    )(oh, w_t, bias_row)


# ----------------------------------------------------------------------------
# Attention module (parameters + forward orchestration)
# ----------------------------------------------------------------------------
class AttentionPallas:
    def __init__(self, embedding_dim, num_heads, downsample_rate=1, dropout=0.0,
                 kv_in_dim=None, key=None):
        self.embedding_dim = embedding_dim
        self.kv_in_dim = kv_in_dim if kv_in_dim is not None else embedding_dim
        self.internal_dim = embedding_dim // downsample_rate
        self.num_heads = num_heads
        assert self.internal_dim % num_heads == 0, "num_heads must divide embedding_dim."
        self.head_dim = self.internal_dim // num_heads
        # TODO(synk): training-mode dropout (dropout_p > 0) not implemented; eval path uses p=0.
        self.dropout_p = dropout

        key = jax.random.PRNGKey(0) if key is None else key
        ks = jax.random.split(key, 8)

        def init_linear(kw, kb, in_dim, out_dim):
            bound = 1.0 / math.sqrt(in_dim)
            w = jax.random.uniform(kw, (out_dim, in_dim), jnp.float32, -bound, bound)
            b = jax.random.uniform(kb, (out_dim,), jnp.float32, -bound, bound)
            return w, b

        # torch.nn.Linear-layout parameters (kept in f32 for the pure-JAX reference).
        self.wq, self.bq = init_linear(ks[0], ks[1], embedding_dim, self.internal_dim)
        self.wk, self.bk = init_linear(ks[2], ks[3], self.kv_in_dim, self.internal_dim)
        self.wv, self.bv = init_linear(ks[4], ks[5], self.kv_in_dim, self.internal_dim)
        self.wo, self.bo = init_linear(ks[6], ks[7], self.internal_dim, embedding_dim)

        scale = 1.0 / math.sqrt(self.head_dim)

        # Pre-transposed bf16 matmul weights (done once at init, not per call).
        # The 1/sqrt(Dh) attention scale is folded into the q projection (free).
        self.wq_t = (jnp.transpose(self.wq) * scale).astype(jnp.bfloat16)  # (E, internal)
        self.bq_r = (self.bq * scale).reshape(1, self.internal_dim)
        self.wk_t = jnp.transpose(self.wk).astype(jnp.bfloat16)
        self.bk_r = self.bk.reshape(1, self.internal_dim)
        self.wv_t = jnp.transpose(self.wv).astype(jnp.bfloat16)
        self.bv_r = self.bv.reshape(1, self.internal_dim)
        self.wo_t = jnp.transpose(self.wo).astype(jnp.bfloat16)            # (internal, E)
        self.bo_r = self.bo.reshape(1, self.embedding_dim)

    def __call__(self, q, k, v):
        H = self.num_heads
        qh = proj_to_heads(q, self.wq_t, self.bq_r, H)   # (B, H, Nq, Dh) bf16, pre-scaled
        kh = proj_to_heads(k, self.wk_t, self.bk_r, H)   # (B, H, Nk, Dh) bf16
        vh = proj_to_heads(v, self.wv_t, self.bv_r, H)   # (B, H, Nk, Dh) bf16
        oh = flash_attention(qh, kh, vh)                 # (B, H, Nq, Dh) bf16
        return out_proj_from_heads(oh, self.wo_t, self.bo_r, q.dtype)   # (B, Nq, E)


# ----------------------------------------------------------------------------
# Pure-JAX f32 reference (same semantics as the PyTorch forward) for validation
# ----------------------------------------------------------------------------
def reference_forward(m, q, k, v):
    B, Nq, _ = q.shape
    Nk = k.shape[1]
    H, Dh = m.num_heads, m.head_dim
    qf = q.reshape(B * Nq, -1) @ m.wq.T + m.bq
    kf = k.reshape(B * Nk, -1) @ m.wk.T + m.bk
    vf = v.reshape(B * Nk, -1) @ m.wv.T + m.bv
    qh = qf.reshape(B, Nq, H, Dh).transpose(0, 2, 1, 3)
    kh = kf.reshape(B, Nk, H, Dh).transpose(0, 2, 1, 3)
    vh = vf.reshape(B, Nk, H, Dh).transpose(0, 2, 1, 3)
    s = jnp.einsum("bhqd,bhkd->bhqk", qh, kh) / math.sqrt(Dh)
    p = jax.nn.softmax(s, axis=-1)
    ohh = jnp.einsum("bhqk,bhkd->bhqd", p, vh)
    o = ohh.transpose(0, 2, 1, 3).reshape(B, Nq, m.internal_dim)
    return (o.reshape(B * Nq, -1) @ m.wo.T + m.bo).reshape(B, Nq, m.embedding_dim)


if __name__ == "__main__":
    key = jax.random.PRNGKey(0)
    kq, kk, kv, kp = jax.random.split(key, 4)

    B, Nq, Nk, E, H = 2, 16, 24, 32, 2   # small cross-attention shapes
    q = jax.random.normal(kq, (B, Nq, E), dtype=jnp.float32)
    k = jax.random.normal(kk, (B, Nk, E), dtype=jnp.float32)
    v = jax.random.normal(kv, (B, Nk, E), dtype=jnp.float32)

    attn = AttentionPallas(embedding_dim=E, num_heads=H, key=kp)

    out = attn(q, k, v)
    out = jax.block_until_ready(out)

    ref = reference_forward(attn, q, k, v)
    assert out.shape == (B, Nq, E)
    # bf16 weights/intermediates -> looser tolerance than a pure-f32 pipeline.
    assert jnp.allclose(out, ref, atol=5e-2, rtol=5e-2), "mismatch vs reference"

    print("KERNEL_OK")
</pallas_src>

<mosaic_0001>
module attributes {stable_mosaic.version = 11 : i64} {
  func.func @_proj_heads_kernel(%arg0: i32, %arg1: i32, %arg2: memref<1x16x32xf32, #tpu.memory_space<vmem>>, %arg3: memref<32x32xbf16, #tpu.memory_space<vmem>>, %arg4: memref<1x32xf32, #tpu.memory_space<vmem>>, %arg5: memref<1x2x16x16xbf16, #tpu.memory_space<vmem>>) attributes {dimension_semantics = [#tpu.dimension_semantics<parallel>, #tpu.dimension_semantics<parallel>], iteration_bounds = array<i64: 2, 1>, scalar_prefetch = 0 : i64, scratch_operands = 0 : i64, tpu.core_type = #tpu.core_type<tc>, window_params = [{transform_indices = @transform_0, window_bounds = array<i64: 1, 16, 32>}, {pipeline_mode = #tpu.pipeline_mode<synchronous>, transform_indices = @transform_1, window_bounds = array<i64: 32, 32>}, {pipeline_mode = #tpu.pipeline_mode<synchronous>, transform_indices = @transform_2, window_bounds = array<i64: 1, 32>}, {transform_indices = @transform_3, window_bounds = array<i64: 1, 2, 16, 16>}]} {
    %c0 = arith.constant 0 : index
    %c0_0 = arith.constant 0 : index
    %c0_1 = arith.constant 0 : index
    %0 = vector.load %arg2[%c0, %c0_0, %c0_1] : memref<1x16x32xf32, #tpu.memory_space<vmem>>, vector<1x16x32xf32>
    %1 = vector.shape_cast %0 : vector<1x16x32xf32> to vector<16x32xf32>
    %2 = arith.truncf %1 : vector<16x32xf32> to vector<16x32xbf16>
    %c0_2 = arith.constant 0 : index
    %c0_3 = arith.constant 0 : index
    %3 = vector.load %arg3[%c0_2, %c0_3] : memref<32x32xbf16, #tpu.memory_space<vmem>>, vector<32x32xbf16>
    %cst = arith.constant dense<0.000000e+00> : vector<16x32xf32>
    %4 = tpu.matmul %2, %3, %cst {dimension_numbers = #tpu.dot_dimension_numbers<[1], [0], [0], [1], [0, 0, 1, 1], [], []>} : vector<16x32xbf16>, vector<32x32xbf16>, vector<16x32xf32> -> vector<16x32xf32>
    %c0_4 = arith.constant 0 : index
    %c0_5 = arith.constant 0 : index
    %5 = vector.load %arg4[%c0_4, %c0_5] : memref<1x32xf32, #tpu.memory_space<vmem>>, vector<1x32xf32>
    %6 = vector.broadcast %5 : vector<1x32xf32> to vector<16x32xf32>
    %7 = arith.addf %4, %6 : vector<16x32xf32>
    %8 = vector.extract_strided_slice %7 {offsets = [0, 0], sizes = [16, 16], strides = [1, 1]} : vector<16x32xf32> to vector<16x16xf32>
    %9 = arith.truncf %8 : vector<16x16xf32> to vector<16x16xbf16>
    %c0_6 = arith.constant 0 : index
    %c0_7 = arith.constant 0 : index
    %c0_8 = arith.constant 0 : index
    %c0_9 = arith.constant 0 : index
    %10 = vector.load %arg5[%c0_6, %c0_7, %c0_8, %c0_9] : memref<1x2x16x16xbf16, #tpu.memory_space<vmem>>, vector<1x1x16x16xbf16>
    %11 = vector.shape_cast %10 : vector<1x1x16x16xbf16> to vector<16x16xbf16>
    %12 = vector.shape_cast %9 : vector<16x16xbf16> to vector<1x1x16x16xbf16>
    tpu.vector_store %arg5[%c0_6, %c0_7, %c0_8, %c0_9], %12 {strides = array<i32>} : memref<1x2x16x16xbf16, #tpu.memory_space<vmem>>, vector<1x1x16x16xbf16>,
    %13 = vector.extract_strided_slice %7 {offsets = [0, 16], sizes = [16, 16], strides = [1, 1]} : vector<16x32xf32> to vector<16x16xf32>
    %14 = arith.truncf %13 : vector<16x16xf32> to vector<16x16xbf16>
    %c0_10 = arith.constant 0 : index
    %c1 = arith.constant 1 : index
    %c0_11 = arith.constant 0 : index
    %c0_12 = arith.constant 0 : index
    %15 = vector.load %arg5[%c0_10, %c1, %c0_11, %c0_12] : memref<1x2x16x16xbf16, #tpu.memory_space<vmem>>, vector<1x1x16x16xbf16>
    %16 = vector.shape_cast %15 : vector<1x1x16x16xbf16> to vector<16x16xbf16>
    %17 = vector.shape_cast %14 : vector<16x16xbf16> to vector<1x1x16x16xbf16>
    tpu.vector_store %arg5[%c0_10, %c1, %c0_11, %c0_12], %17 {strides = array<i32>} : memref<1x2x16x16xbf16, #tpu.memory_space<vmem>>, vector<1x1x16x16xbf16>,
    return
  }
  func.func @transform_0(%arg0: i32, %arg1: i32) -> (i32, i32, i32) {
    %c0_i32 = arith.constant 0 : i32
    %c0_i32_0 = arith.constant 0 : i32
    return %arg0, %arg1, %c0_i32 : i32, i32, i32
  }
  func.func @transform_1(%arg0: i32, %arg1: i32) -> (i32, i32) {
    %c0_i32 = arith.constant 0 : i32
    %c0_i32_0 = arith.constant 0 : i32
    %c0_i32_1 = arith.constant 0 : i32
    return %c0_i32, %c0_i32_0 : i32, i32
  }
  func.func @transform_2(%arg0: i32, %arg1: i32) -> (i32, i32) {
    %c0_i32 = arith.constant 0 : i32
    %c0_i32_0 = arith.constant 0 : i32
    %c0_i32_1 = arith.constant 0 : i32
    return %c0_i32, %c0_i32_0 : i32, i32
  }
  func.func @transform_3(%arg0: i32, %arg1: i32) -> (i32, i32, i32, i32) {
    %c0_i32 = arith.constant 0 : i32
    %c0_i32_0 = arith.constant 0 : i32
    %c0_i32_1 = arith.constant 0 : i32
    return %arg0, %c0_i32, %arg1, %c0_i32_0 : i32, i32, i32, i32
  }
}

</mosaic_0001>

<llo_original>
// kernel: tpu_custom_call.1
$region0: #{tpu_custom_call.1}
  #allocation0 [shape = 'u32[]', space=smem, size = 0x4, offset = 0x4, fixed_abs, tag = 'smem constant byte address 0x4 - core index']
  #allocation1 [shape = 'u32[72,128]{1,0:T(1,128)}', space=vmem, size = 0x9000, scoped, tag = 'internal scratch']
  %s0 = inlined_call_operand.hbm [shape: f32[2,16,32], index: 0, kind: input, shape index: {}]
  %s1 = inlined_call_operand.hbm [shape: bf16[32,32], index: 1, kind: input, shape index: {}]
  %s2 = inlined_call_operand.vmem [shape: f32[1,32], index: 2, kind: input, shape index: {}]
  %s3 = inlined_call_operand.hbm [shape: bf16[2,2,16,16], index: 3, kind: output, shape index: {}]
  %s4 = sld [smem:[#allocation0]]
  $region53: #{tpu_custom_call.1} parent=0
    _
  %s6 = ssub.s32 1, %s4
  %s7 = scalar_select 0, %s6, %s4
  $region1: #{tpu_custom_call.1} parent=0
    #allocation2 [shape = 'u8[16384]{0}', space=vmem, size = 0x4000, scoped, tag = 'input window, operand 0']
    #allocation3 [shape = 's32[2]{0}', space=sflag, size = 0x8, scoped, tag = 'scoped memory for tpu_custom_call.1']
    #allocation4 [shape = 's32[2]{0}', space=sflag, size = 0x8, scoped, tag = 'scoped memory for tpu_custom_call.1']
    #allocation5 [shape = 'u8[8192]{0}', space=vmem, size = 0x2000, scoped, tag = 'input window, operand 1, single buffered']
    #allocation6 [shape = 's32[1]{0}', space=sflag, size = 0x4, scoped, tag = 'scoped memory for tpu_custom_call.1']
    #allocation7 [shape = 'u8[16384]{0}', space=vmem, size = 0x4000, scoped, tag = 'output window, operand 0']
    %8 = vsyncpa [#allocation3], 0
    %s9 = scalar_lea.sflag [#allocation3], 1
    %10 = vsyncpa %s9, 0
    %11 = vsyncpa [#allocation6], 0
    %12 = vsyncpa [#allocation4], 0
    %s13 = scalar_lea.sflag [#allocation4], 1
    %14 = vsyncpa %s13, 0
    loop: start=0, step=1, limit=4
    $region2: #{tpu_custom_call.1} parent=1 // loop_pre_header
      _
    $region3: #{tpu_custom_call.1} parent=1 // loop_header
      %s16 = sphi 0, %s20
      %p17 = scmp.ge.s32.totalorder %s16, 4
      %s23 = sphi 0, %s35
      %s24 = sphi 0, %s31
      %s25 = sphi 0, %s23
      %s26 = sphi 0, %s24
      %s27 = sphi 0, %s25
      %s28 = sphi 0, %s26
      %s40 = sphi 0, %s42
      %s43 = sphi 0, %s40
      %s44 = sphi 0, %s43
      %s60 = sphi 0, %s44
      %s64 = sphi 0, %s64
      %s66 = sphi 0, %s64
      %s67 = sphi 0, %s66
      %s81 = sphi 0, %s67
      %s85 = sphi 0, %s85
      %s87 = sphi 0, %s85
      %s88 = sphi 0, %s87
      %s102 = sphi 0, %s88
      %s110 = sphi 0, %s112
      %s113 = sphi 0, %s110
      %s114 = sphi 0, %s113
      %s130 = sphi 0, %s114
    $region4: #{tpu_custom_call.1} parent=1 // loop_header_branch
      %19 = sbr.rel (%p17) target = $region8
    $region5: #{tpu_custom_call.1} parent=1 // loop_body
      %s21 = ssub.s32 %s16, 1
      %s22 = ssub.s32 %s16, 2
      %s29 = sadd.s32 1, %s24
      %p30 = scmp.ge.s32.totalorder %s29, 1
      %s31 = scalar_select %p30, 0, %s29
      %s32 = sadd.s32 1, %s23
      %s33 = scalar_select %p30, %s32, %s23
      %p34 = scmp.ge.s32.totalorder %s33, 2
      %s35 = scalar_select %p34, 0, %s33
      %s36 = ssub.s32 %s23, %s35
      %s37 = ssub.s32 %s24, %s31
      %s38 = sor.u32 %s36, %s37
      %p39 = scmp.eq.s32.totalorder %s38, 0
      %s41 = sadd.s32 %s40, 1
      %s42 = scalar_select %p39, %s40, %s41
      %p45 = pneg %p39
      %p46 = scmp.eq.s32.totalorder %s16, 1
      %p47 = por %p45, %p46
      %p48 = scmp.ne.s32.totalorder %s40, %s43
      %p49 = scmp.eq.s32.totalorder %s16, 0
      %p50 = por %p48, %p49
      %p51 = scmp.ne.s32.totalorder %s40, %s43
      %p52 = scmp.eq.s32.totalorder %s21, 1
      %p53 = por %p51, %p52
      %p54 = scmp.ne.s32.totalorder %s43, %s44
      %p55 = scmp.eq.s32.totalorder %s21, 0
      %p56 = por %p54, %p55
      %p57 = scmp.ne.s32.totalorder %s43, %s44
      %p58 = scmp.eq.s32.totalorder %s22, 1
      %p59 = por %p57, %p58
      %p61 = scmp.ne.s32.totalorder %s44, %s60
      %p62 = scmp.eq.s32.totalorder %s22, 0
      %p63 = por %p61, %p62
      %s65 = sadd.s32 %s64, 1
      %p68 = scmp.eq.s32.totalorder %s16, 1
      %p69 = scmp.ne.s32.totalorder %s64, %s66
      %p70 = scmp.eq.s32.totalorder %s16, 0
      %p71 = por %p69, %p70
      %p72 = scmp.ne.s32.totalorder %s64, %s66
      %p73 = scmp.eq.s32.totalorder %s21, 1
      %p74 = por %p72, %p73
      %p75 = scmp.ne.s32.totalorder %s66, %s67
      %p76 = scmp.eq.s32.totalorder %s21, 0
      %p77 = por %p75, %p76
      %p78 = scmp.ne.s32.totalorder %s66, %s67
      %p79 = scmp.eq.s32.totalorder %s22, 1
      %p80 = por %p78, %p79
      %p82 = scmp.ne.s32.totalorder %s67, %s81
      %p83 = scmp.eq.s32.totalorder %s22, 0
      %p84 = por %p82, %p83
      %s86 = sadd.s32 %s85, 1
      %p89 = scmp.eq.s32.totalorder %s16, 1
      %p90 = scmp.ne.s32.totalorder %s85, %s87
      %p91 = scmp.eq.s32.totalorder %s16, 0
      %p92 = por %p90, %p91
      %p93 = scmp.ne.s32.totalorder %s85, %s87
      %p94 = scmp.eq.s32.totalorder %s21, 1
      %p95 = por %p93, %p94
      %p96 = scmp.ne.s32.totalorder %s87, %s88
      %p97 = scmp.eq.s32.totalorder %s21, 0
      %p98 = por %p96, %p97
      %p99 = scmp.ne.s32.totalorder %s87, %s88
      %p100 = scmp.eq.s32.totalorder %s22, 1
      %p101 = por %p99, %p100
      %p103 = scmp.ne.s32.totalorder %s88, %s102
      %p104 = scmp.eq.s32.totalorder %s22, 0
      %p105 = por %p103, %p104
      %s106 = ssub.s32 %s23, %s35
      %s107 = ssub.s32 %s24, %s31
      %s108 = sor.u32 %s106, %s107
      %p109 = scmp.eq.s32.totalorder %s108, 0
      %s111 = sadd.s32 %s110, 1
      %s112 = scalar_select %p109, %s110, %s111
      %p115 = pneg %p109
      %p116 = scmp.eq.s32.totalorder %s16, 1
      %p117 = por %p115, %p116
      %p118 = scmp.ne.s32.totalorder %s110, %s113
      %p119 = scmp.eq.s32.totalorder %s16, 0
      %p120 = por %p118, %p119
      %p121 = scmp.ne.s32.totalorder %s110, %s113
      %p122 = scmp.eq.s32.totalorder %s21, 1
      %p123 = por %p121, %p122
      %p124 = scmp.ne.s32.totalorder %s113, %s114
      %p125 = scmp.eq.s32.totalorder %s21, 0
      %p126 = por %p124, %p125
      %p127 = scmp.ne.s32.totalorder %s113, %s114
      %p128 = scmp.eq.s32.totalorder %s22, 1
      %p129 = por %p127, %p128
      %p131 = scmp.ne.s32.totalorder %s114, %s130
      %p132 = scmp.eq.s32.totalorder %s22, 0
      %p133 = por %p131, %p132
      %p134 = scmp.le.s32.totalorder 1, %s16
      %p135 = scmp.lt.s32.totalorder %s16, 3
      %p136 = pnand %p134, %p135
      %p137 = pneg %p136
      // Predicated region
      $region9: #{tpu_custom_call.1} parent=5 // pred_check
        _
      $region10: #{tpu_custom_call.1} parent=5 // pred_check_branch
        %139 = sbr.rel (%p136) target = $region12
      $region11: #{tpu_custom_call.1} parent=5 // pred_region
        %s140 = ssub.s32 %s16, 1
        // Predicated region
        $region13: #{tpu_custom_call.1} parent=11 // pred_check
          %p141 = pneg %p77
        $region14: #{tpu_custom_call.1} parent=11 // pred_check_branch
          %143 = sbr.rel (%p141) target = $region16
        $region15: #{tpu_custom_call.1} parent=11 // pred_region
          %145 = vsyncadd [#allocation6], 0
          %s146 = sshll.u32 %s1, 4
          %s147 = int_to_ptr.hbm [resolvable:$true] %s146
          %s148 = sshll.u32 [#allocation5], 4
          %s149 = int_to_ptr.vmem [resolvable:$true] %s148
          %154 = dma.hbm_to_vmem [thread:$0]  %s147, 256, %s149, [#allocation6], 64, 64, 4
        $region16: #{tpu_custom_call.1} parent=11 // pred_fallthru
          _
        // Predicated region
        $region17: #{tpu_custom_call.1} parent=11 // pred_check
          %p155 = pneg %p98
        $region18: #{tpu_custom_call.1} parent=11 // pred_check_branch
          %157 = sbr.rel (%p155) target = $region20
        $region19: #{tpu_custom_call.1} parent=11 // pred_region
          _
        $region20: #{tpu_custom_call.1} parent=11 // pred_fallthru
          _
      $region12: #{tpu_custom_call.1} parent=5 // pred_fallthru
        _
      %p158 = scmp.lt.s32.totalorder %s16, 2
      // Predicated region
      $region21: #{tpu_custom_call.1} parent=5 // pred_check
        %p159 = pneg %p158
      $region22: #{tpu_custom_call.1} parent=5 // pred_check_branch
        %161 = sbr.rel (%p159) target = $region24
      $region23: #{tpu_custom_call.1} parent=5 // pred_region
        // Predicated region
        $region25: #{tpu_custom_call.1} parent=23 // pred_check
          %p162 = pneg %p50
        $region26: #{tpu_custom_call.1} parent=23 // pred_check_branch
          %164 = sbr.rel (%p162) target = $region28
        $region27: #{tpu_custom_call.1} parent=23 // pred_region
          %s165 = sand.u32 %s40, 1
          %s166 = scalar_lea.sflag [#allocation3], %s165
          %s167 = sand.u32 %s40, 1
          %s168 = smul.addr %s167, 16
          %s169 = scalar_lea.vmem [#allocation2], %s168
          %s170 = smul.u32 2, %s24
          %172 = vsyncadd %s166, 0
          %s173 = smul.addr %s23, 2
          %s174 = sadd.s32 %s170, %s173
          %s175 = smul.addr %s174, 8
          %s176 = scalar_lea.hbm %s0, %s175
          %s177 = sshll.u32 %s176, 4
          %s178 = int_to_ptr.hbm [resolvable:$true] %s177
          %s179 = sshll.u32 %s169, 4
          %s180 = int_to_ptr.vmem [resolvable:$true] %s179
          %185 = dma.hbm_to_vmem [thread:$0]  %s178, 256, %s180, %s166, 128, 128, 8
        $region28: #{tpu_custom_call.1} parent=23 // pred_fallthru
          _
      $region24: #{tpu_custom_call.1} parent=5 // pred_fallthru
        _
      %p186 = scmp.le.s32.totalorder 1, %s16
      %p187 = scmp.lt.s32.totalorder %s16, 3
      %p188 = pnand %p186, %p187
      %p189 = pneg %p188
      // Predicated region
      $region29: #{tpu_custom_call.1} parent=5 // pred_check
        _
      $region30: #{tpu_custom_call.1} parent=5 // pred_check_branch
        %191 = sbr.rel (%p188) target = $region32
      $region31: #{tpu_custom_call.1} parent=5 // pred_region
        %s192 = ssub.s32 %s16, 1
        %s193 = sand.u32 %s43, 1
        %s194 = scalar_lea.sflag [#allocation3], %s193
        %s195 = sand.u32 %s43, 1
        %s196 = smul.addr %s195, 16
        %s197 = scalar_lea.vmem [#allocation2], %s196
        // Predicated region
        $region33: #{tpu_custom_call.1} parent=31 // pred_check
          %p198 = pneg %p56
        $region34: #{tpu_custom_call.1} parent=31 // pred_check_branch
          %200 = sbr.rel (%p198) target = $region36
        $region35: #{tpu_custom_call.1} parent=31 // pred_region
          %202 = dma.done %s194, 256
        $region36: #{tpu_custom_call.1} parent=31 // pred_fallthru
          _
        // Predicated region
        $region37: #{tpu_custom_call.1} parent=31 // pred_check
          %p203 = pneg %p77
        $region38: #{tpu_custom_call.1} parent=31 // pred_check_branch
          %205 = sbr.rel (%p203) target = $region40
        $region39: #{tpu_custom_call.1} parent=31 // pred_region
          %207 = dma.done [#allocation6], 256
        $region40: #{tpu_custom_call.1} parent=31 // pred_fallthru
          _
        %s208 = sand.u32 %s43, 1
        %s209 = scalar_lea.sflag [#allocation3], %s208
        %s210 = sand.u32 %s43, 1
        %s211 = smul.addr %s210, 16
        %s212 = scalar_lea.vmem [#allocation2], %s211
        %p213 = pneg %p56
        %p214 = pneg %p53
        %p215 = pneg %p77
        %p216 = pneg %p74
        %p217 = pneg %p98
        %p218 = pneg %p95
        %p219 = pneg %p126
        %p220 = pneg %p123
        %s221 = sand.u32 %s113, 1
        %s222 = scalar_lea.sflag [#allocation4], %s221
        %s223 = sand.u32 %s113, 1
        %s224 = smul.addr %s223, 16
        %s225 = scalar_lea.vmem [#allocation7], %s224
        %s226 = smul.u32 2, %s26
        %s227 = smul.u32 2, %s26
        %v229 = vld [vmem:[%s197] sm:$0xff]
        %v230 = vld [vmem:[%s197 + $0x8] sm:$0xff]
        %v231 = vpack.c.bf16 %v230, %v229
        %v232 = vld [vmem:[#allocation5] sm:$0xf]
        %v233 = vld [vmem:[#allocation5 + $0x4] sm:$0xf]
        %v234 = vld [vmem:[#allocation5 + $0x8] sm:$0xf]
        %v235 = vld [vmem:[#allocation5 + $0xc] sm:$0xf]
        %v236 = vld [vmem:[%s2] sm:$0x1]
        %v238 = vperm.slane %v236, 0
        %v244 = vunpack.c.l.b16 %v232
        %v245 = vunpack.c.l.b16 %v233
        %v246 = vunpack.c.l.b16 %v234
        %v247 = vunpack.c.l.b16 %v235
        %v248 = vpack.c.b16 %v245, %v244
        %v249 = vpack.c.b16 %v247, %v246
        %vm252 = vcmask 261120
        %v254 = vsel %vm252, %v231, 0
        %256 = vmatpush.bf16.msra.mxu0 0
        %257 = vmatpush.bf16.msra.mxu0 0
        %258 = vmatpush.bf16.msra.mxu0 0
        %259 = vmatpush.bf16.msra.mxu0 0
        %260 = vmatpush.bf16.msra.mxu0 0
        %261 = vmatpush.bf16.msra.mxu0 0
        %262 = vmatpush.bf16.msra.mxu0 %v249
        %263 = vmatpush.bf16.msra.mxu0 %v248
        %264 = vmatmul.bf16.gmra.mxu0 %v254
        %v265 = vpop.f32.mrf.mxu0
        %v266 = vadd.f32 %v238, %v265
        %v267 = vpop.f32.mrf.mxu0
        %v268 = vadd.f32 %v238, %v267
        %269 = vdwg.mxu0
        %v270 = vpack.c.bf16 %v266, %v266
        %v271 = vpack.c.bf16 %v268, %v268
        %vm272 = vcmask 125952
        %273 = vst.msk [vmem:[%s225] sm:$0xf] %vm272, %v270
        %274 = vst.msk [vmem:[%s225 + $0x4] sm:$0xf] %vm272, %v271
        %277 = vrot.lane.b32.xlu0 %v270, 112
        %v278 = vpop.permute.xlu0 %277
        %279 = vrot.lane.b32.xlu0 %v271, 112
        %v280 = vpop.permute.xlu0 %279
        %s283 = scalar_lea.vmem %s225, 8 [#allocation7]
        %284 = vst.msk [vmem:[%s283] sm:$0xf] %vm272, %v278
        %285 = vst.msk [vmem:[%s283 + $0x4] sm:$0xf] %vm272, %v280
        %s286 = sand.u32 %s113, 1
        %s287 = scalar_lea.sflag [#allocation4], %s286
        %s288 = sand.u32 %s113, 1
        %s289 = smul.addr %s288, 16
        %s290 = scalar_lea.vmem [#allocation7], %s289
        // Predicated region
        $region41: #{tpu_custom_call.1} parent=31 // pred_check
          %p291 = pneg %p123
        $region42: #{tpu_custom_call.1} parent=31 // pred_check_branch
          %293 = sbr.rel (%p291) target = $region44
        $region43: #{tpu_custom_call.1} parent=31 // pred_region
          %s294 = smul.u32 2, %s26
          %296 = vsyncadd %s287, 0
          %s297 = smul.addr %s25, 4
          %s298 = sadd.s32 %s294, %s297
          %s299 = smul.addr %s298, 4
          %s300 = scalar_lea.hbm %s3, %s299
          %s301 = sshll.u32 %s290, 4
          %s302 = int_to_ptr.vmem [resolvable:$true] %s301
          %s303 = sshll.u32 %s300, 4
          %s304 = int_to_ptr.hbm [resolvable:$true] %s303
          %309 = dma.vmem_to_hbm [thread:$0]  %s302, 256, %s304, %s287, 64, 64, 4
        $region44: #{tpu_custom_call.1} parent=31 // pred_fallthru
          _
      $region32: #{tpu_custom_call.1} parent=5 // pred_fallthru
        _
      %p310 = scmp.le.s32.totalorder 2, %s16
      // Predicated region
      $region45: #{tpu_custom_call.1} parent=5 // pred_check
        %p311 = pneg %p310
      $region46: #{tpu_custom_call.1} parent=5 // pred_check_branch
        %313 = sbr.rel (%p311) target = $region48
      $region47: #{tpu_custom_call.1} parent=5 // pred_region
        %s314 = ssub.s32 %s16, 2
        // Predicated region
        $region49: #{tpu_custom_call.1} parent=47 // pred_check
          %p315 = pneg %p129
        $region50: #{tpu_custom_call.1} parent=47 // pred_check_branch
          %317 = sbr.rel (%p315) target = $region52
        $region51: #{tpu_custom_call.1} parent=47 // pred_region
          %s318 = sand.u32 %s114, 1
          %s319 = scalar_lea.sflag [#allocation4], %s318
          %s320 = sand.u32 %s114, 1
          %s321 = smul.addr %s320, 16
          %s322 = scalar_lea.vmem [#allocation7], %s321
          %324 = dma.done %s319, 256
        $region52: #{tpu_custom_call.1} parent=47 // pred_fallthru
          _
      $region48: #{tpu_custom_call.1} parent=5 // pred_fallthru
        _
    $region6: #{tpu_custom_call.1} parent=1 // loop_footer
      %s20 = sadd.s32 1, %s16
    $region7: #{tpu_custom_call.1} parent=1 // loop_footer_branch
      %15 = sbr.rel target = $region3
    $region8: #{tpu_custom_call.1} parent=1 // loop_exit
      _
    %325 = vsyncpa [#allocation3], 1
    %s326 = scalar_lea.sflag [#allocation3], 1
    %327 = vsyncpa %s326, 1
    %328 = vsyncpa [#allocation6], 1
    %329 = vsyncpa [#allocation4], 1
    %s330 = scalar_lea.sflag [#allocation4], 1
    %331 = vsyncpa %s330, 1

</llo_original>
